<compile_context>
chip_gen: v7x
topology: tpu7x:2x2x1
jax: 0.10.0
libtpu: 0.0.40
codegen_flags: <defaults>
</compile_context>

<pallas_src>
import functools

import jax
import jax.numpy as jnp
from jax.experimental import pallas as pl
from jax.experimental.pallas import tpu as pltpu


# --------------------------------------------------------------------------
# Tile / budget helpers
# --------------------------------------------------------------------------
def _pick_tile(n, preferred, aligns):
    """Largest divisor of n that is <= preferred and a multiple of an alignment.

    Falls back to the full dimension (always BlockSpec-legal) if nothing
    aligned divides n.
    """
    cap = min(n, preferred)
    for align in aligns:
        d = cap - (cap % align)
        while d > 0:
            if n % d == 0:
                return d
            d -= align
    return n


def _device_kind():
    try:
        return jax.devices()[0].device_kind.lower()
    except Exception:
        return ""


def _vmem_capacity_bytes():
    try:
        return int(pltpu.get_tpu_info().vmem_capacity_bytes)
    except Exception:
        # v7x has 64 MiB per TensorCore; v5e/v6e have 128 MiB.
        return (64 << 20) if "v7" in _device_kind() else (128 << 20)


def _default_seq_pref():
    # v5e machine balance ~240 flop/byte -> ts=256 is already compute-bound;
    # v6e/v7x ~620-640 flop/byte -> ts>=512 keeps the weight stream MXU-bound.
    return 256 if "v5" in _device_kind() else 512


def _pick_seq_tile(S, preferred):
    ts = _pick_tile(S, preferred, aligns=(128, 8))
    # Keep >= 2 seq tiles when possible: the seq axis is the only "parallel"
    # grid axis, so a single tile leaves one v7x TensorCore idle.
    if S // ts < 2:
        smaller = _pick_tile(S, max(ts // 2, 1), aligns=(128, 8))
        if smaller < ts and S // smaller >= 2:
            ts = smaller
    return ts


def _vmem_estimate(ts, tf, D, bpe):
    """Rough VMEM bytes: double-buffered streams + f32 scratch/intermediates,
    with a 1.25x factor for Mosaic internal scratch / spills."""
    streams = 2 * (2 * ts * D * bpe        # x in + out (double buffered)
                   + 2 * D * tf * bpe      # w1 + w3 tiles
                   + tf * D * bpe)         # w2 tile
    acc = ts * D * 4                       # f32 accumulator scratch
    interm = 3 * ts * tf * 4               # gate / up / h live f32 values
    return int((streams + acc + interm) * 1.25)


# --------------------------------------------------------------------------
# Kernel
# --------------------------------------------------------------------------
def _mixtral_mlp_kernel(x_ref, w1_ref, w3_ref, w2_ref, o_ref, acc_ref, *,
                        inv_linear_scale):
    k = pl.program_id(1)

    @pl.when(k == 0)
    def _init():
        acc_ref[...] = jnp.zeros_like(acc_ref)

    x = x_ref[...]                                   # (ts, D) bf16

    # Gate / up projections for this F tile (MXU, f32 accumulate).
    gate = jnp.dot(x, w1_ref[...], preferred_element_type=jnp.float32)  # (ts, tf)
    up = jnp.dot(x, w3_ref[...], preferred_element_type=jnp.float32)    # (ts, tf)
    if inv_linear_scale is not None:
        gate = gate * inv_linear_scale
        up = up * inv_linear_scale

    # SiLU + product in f32 (EUP sigmoid + VPU), single cast of h to bf16.
    h = ((gate * jax.nn.sigmoid(gate)) * up).astype(x.dtype)            # (ts, tf)

    # Partial down-projection, accumulated across F tiles in f32 scratch.
    acc_ref[...] += jnp.dot(h, w2_ref[...], preferred_element_type=jnp.float32)

    @pl.when(k == pl.num_programs(1) - 1)
    def _finalize():
        down = acc_ref[...]
        if inv_linear_scale is not None:
            down = down * inv_linear_scale
        o_ref[...] = down.astype(o_ref.dtype)


# --------------------------------------------------------------------------
# Wrapper
# --------------------------------------------------------------------------
def mixtral_mlp(x, w1, w3, w2, *, inv_linear_scale=None, seq_tile=None,
                f_tile=None, single_buffer_x=False):
    """x: (S, D) bf16; w1, w3: (D, F); w2: (F, D). Returns (S, D) bf16."""
    S, D = x.shape
    F = w1.shape[1]
    assert w1.shape == (D, F) and w3.shape == (D, F) and w2.shape == (F, D)

    vmem_cap = _vmem_capacity_bytes()
    budget = int(vmem_cap * 0.85)          # ~15% headroom for Mosaic scratch
    bpe = jnp.dtype(x.dtype).itemsize

    ts = seq_tile if seq_tile is not None else _pick_seq_tile(S, _default_seq_pref())
    tf = f_tile if f_tile is not None else _pick_tile(F, 512, aligns=(256, 128))

    # Auto-shrink to fit the per-generation VMEM budget: tf first (cuts the
    # double-buffered weight tiles without changing total weight traffic),
    # then ts as a last resort (ts sets the flop/byte of the weight stream).
    if f_tile is None:
        while _vmem_estimate(ts, tf, D, bpe) > budget and tf > 128:
            new_tf = _pick_tile(F, tf // 2, aligns=(256, 128))
            if new_tf >= tf:
                break
            tf = new_tf
    if seq_tile is None:
        while _vmem_estimate(ts, tf, D, bpe) > budget and ts > 8:
            new_ts = _pick_tile(S, ts // 2, aligns=(128, 8))
            if new_ts >= ts:
                break
            ts = new_ts

    assert S % ts == 0 and F % tf == 0
    # (8,128) BlockSpec legality for the streamed weight / activation tiles.
    assert tf == F or tf % 128 == 0, f"f_tile={tf} must be 128-aligned or == F"
    assert ts == S or ts % 8 == 0, f"seq_tile={ts} must be 8-aligned or == S"
    kt = F // tf

    vmem_limit = int(min(budget, max(_vmem_estimate(ts, tf, D, bpe), 16 << 20)))

    # x's block index is constant across the inner k axis; single-buffering it
    # saves ts*D*2 bytes of the tight v7x VMEM budget at the cost of one
    # exposed x DMA per seq tile.
    if single_buffer_x:
        x_spec = pl.BlockSpec((ts, D), lambda i, k: (i, 0),
                              pipeline_mode=pl.Buffered(1))
    else:
        x_spec = pl.BlockSpec((ts, D), lambda i, k: (i, 0))

    kernel = functools.partial(_mixtral_mlp_kernel,
                               inv_linear_scale=inv_linear_scale)

    return pl.pallas_call(
        kernel,
        out_shape=jax.ShapeDtypeStruct((S, D), x.dtype),
        grid_spec=pltpu.PrefetchScalarGridSpec(
            num_scalar_prefetch=0,
            grid=(S // ts, kt),                     # seq parallel, F reduction last
            in_specs=[
                x_spec,                                        # x tile (ts, D)
                pl.BlockSpec((D, tf), lambda i, k: (0, k)),    # w1 tile (D, tf)
                pl.BlockSpec((D, tf), lambda i, k: (0, k)),    # w3 tile (D, tf)
                pl.BlockSpec((tf, D), lambda i, k: (k, 0)),    # w2 tile (tf, D)
            ],
            out_specs=pl.BlockSpec((ts, D), lambda i, k: (i, 0)),
            scratch_shapes=[pltpu.VMEM((ts, D), jnp.float32)],  # f32 accumulator
        ),
        compiler_params=pltpu.CompilerParams(
            dimension_semantics=("parallel", "arbitrary"),
            vmem_limit_bytes=vmem_limit,
        ),
    )(x, w1, w3, w2)


# --------------------------------------------------------------------------
# Pure-JAX reference
# --------------------------------------------------------------------------
def mixtral_mlp_ref(x, w1, w3, w2, inv_linear_scale=None):
    gate = jnp.dot(x, w1, preferred_element_type=jnp.float32)
    up = jnp.dot(x, w3, preferred_element_type=jnp.float32)
    if inv_linear_scale is not None:
        gate = gate * inv_linear_scale
        up = up * inv_linear_scale
    h = ((gate * jax.nn.sigmoid(gate)) * up).astype(x.dtype)
    down = jnp.dot(h, w2, preferred_element_type=jnp.float32)
    if inv_linear_scale is not None:
        down = down * inv_linear_scale
    return down.astype(x.dtype)


if __name__ == "__main__":
    # Small config consistent with the module: inner_dim = num_head * head_dim
    num_head, head_dim = 4, 8          # inner_dim D = 32
    mlp_inner_dim = 256                # F
    seq = 16                           # S
    D = num_head * head_dim
    F = mlp_inner_dim

    key = jax.random.PRNGKey(0)
    kx, k1, k2, k3 = jax.random.split(key, 4)

    x = (jax.random.normal(kx, (seq, D), dtype=jnp.float32) * 0.5).astype(jnp.bfloat16)
    # torch Linear weight is [out, in]; stored pre-transposed for x @ W
    w1 = (jax.random.normal(k1, (D, F), dtype=jnp.float32) * 0.05).astype(jnp.bfloat16)
    w3 = (jax.random.normal(k3, (D, F), dtype=jnp.float32) * 0.05).astype(jnp.bfloat16)
    w2 = (jax.random.normal(k2, (F, D), dtype=jnp.float32) * 0.05).astype(jnp.bfloat16)

    ref = mixtral_mlp_ref(x, w1, w3, w2)

    # 1) auto-picked tiles (>= 2 seq tiles, single F tile at these toy shapes)
    out_auto = jax.block_until_ready(mixtral_mlp(x, w1, w3, w2))
    # 2) force the F-streaming / f32-accumulation path: grid = (2, 2)
    out_tiled = jax.block_until_ready(
        mixtral_mlp(x, w1, w3, w2, seq_tile=8, f_tile=128))

    for out in (out_auto, out_tiled):
        assert out.shape == (seq, D) and out.dtype == jnp.bfloat16
        err = jnp.max(jnp.abs(out.astype(jnp.float32) - ref.astype(jnp.float32)))
        assert float(err) < 2e-2, f"mismatch vs reference: {err}"

    print("KERNEL_OK")
</pallas_src>

<mosaic_0001>
module attributes {stable_mosaic.version = 11 : i64} {
  func.func @_mixtral_mlp_kernel(%arg0: i32, %arg1: i32, %arg2: memref<8x32xbf16, #tpu.memory_space<vmem>>, %arg3: memref<32x256xbf16, #tpu.memory_space<vmem>>, %arg4: memref<32x256xbf16, #tpu.memory_space<vmem>>, %arg5: memref<256x32xbf16, #tpu.memory_space<vmem>>, %arg6: memref<8x32xbf16, #tpu.memory_space<vmem>>, %arg7: memref<8x32xf32, #tpu.memory_space<vmem>>) attributes {dimension_semantics = [#tpu.dimension_semantics<parallel>, #tpu.dimension_semantics<arbitrary>], iteration_bounds = array<i64: 2, 1>, scalar_prefetch = 0 : i64, scratch_operands = 1 : i64, tpu.core_type = #tpu.core_type<tc>, window_params = [{transform_indices = @transform_0, window_bounds = array<i64: 8, 32>}, {transform_indices = @transform_1, window_bounds = array<i64: 32, 256>}, {transform_indices = @transform_2, window_bounds = array<i64: 32, 256>}, {transform_indices = @transform_3, window_bounds = array<i64: 256, 32>}, {transform_indices = @transform_4, window_bounds = array<i64: 8, 32>}]} {
    %c0_i32 = arith.constant 0 : i32
    %0 = arith.cmpi eq, %arg1, %c0_i32 : i32
    %1 = arith.extui %0 : i1 to i32
    %c0_i32_0 = arith.constant 0 : i32
    %2 = arith.cmpi ne, %1, %c0_i32_0 : i32
    scf.if %2 {
      %cst_17 = arith.constant 0.000000e+00 : f32
      %24 = vector.broadcast %cst_17 : f32 to vector<8x32xf32>
      %c0_18 = arith.constant 0 : index
      %c0_19 = arith.constant 0 : index
      %25 = vector.load %arg7[%c0_18, %c0_19] : memref<8x32xf32, #tpu.memory_space<vmem>>, vector<8x32xf32>
      tpu.vector_store %arg7[%c0_18, %c0_19], %24 {strides = array<i32>} : memref<8x32xf32, #tpu.memory_space<vmem>>, vector<8x32xf32>,
    } else {
    }
    %c0 = arith.constant 0 : index
    %c0_1 = arith.constant 0 : index
    %3 = vector.load %arg2[%c0, %c0_1] : memref<8x32xbf16, #tpu.memory_space<vmem>>, vector<8x32xbf16>
    %c0_2 = arith.constant 0 : index
    %c0_3 = arith.constant 0 : index
    %4 = vector.load %arg3[%c0_2, %c0_3] : memref<32x256xbf16, #tpu.memory_space<vmem>>, vector<32x256xbf16>
    %cst = arith.constant dense<0.000000e+00> : vector<8x256xf32>
    %5 = tpu.matmul %3, %4, %cst {dimension_numbers = #tpu.dot_dimension_numbers<[1], [0], [0], [1], [0, 0, 1, 1], [], []>} : vector<8x32xbf16>, vector<32x256xbf16>, vector<8x256xf32> -> vector<8x256xf32>
    %c0_4 = arith.constant 0 : index
    %c0_5 = arith.constant 0 : index
    %6 = vector.load %arg4[%c0_4, %c0_5] : memref<32x256xbf16, #tpu.memory_space<vmem>>, vector<32x256xbf16>
    %cst_6 = arith.constant dense<0.000000e+00> : vector<8x256xf32>
    %7 = tpu.matmul %3, %6, %cst_6 {dimension_numbers = #tpu.dot_dimension_numbers<[1], [0], [0], [1], [0, 0, 1, 1], [], []>} : vector<8x32xbf16>, vector<32x256xbf16>, vector<8x256xf32> -> vector<8x256xf32>
    %8 = arith.negf %5 : vector<8x256xf32>
    %9 = math.exp %8 : vector<8x256xf32>
    %cst_7 = arith.constant 1.000000e+00 : f32
    %10 = vector.broadcast %cst_7 : f32 to vector<8x256xf32>
    %11 = arith.addf %10, %9 : vector<8x256xf32>
    %12 = arith.divf %10, %11 : vector<8x256xf32>
    %13 = arith.mulf %5, %12 : vector<8x256xf32>
    %14 = arith.mulf %13, %7 : vector<8x256xf32>
    %15 = arith.truncf %14 : vector<8x256xf32> to vector<8x256xbf16>
    %c0_8 = arith.constant 0 : index
    %c0_9 = arith.constant 0 : index
    %16 = vector.load %arg7[%c0_8, %c0_9] : memref<8x32xf32, #tpu.memory_space<vmem>>, vector<8x32xf32>
    %c0_10 = arith.constant 0 : index
    %c0_11 = arith.constant 0 : index
    %17 = vector.load %arg5[%c0_10, %c0_11] : memref<256x32xbf16, #tpu.memory_space<vmem>>, vector<256x32xbf16>
    %cst_12 = arith.constant dense<0.000000e+00> : vector<8x32xf32>
    %18 = tpu.matmul %15, %17, %cst_12 {dimension_numbers = #tpu.dot_dimension_numbers<[1], [0], [0], [1], [0, 0, 1, 1], [], []>} : vector<8x256xbf16>, vector<256x32xbf16>, vector<8x32xf32> -> vector<8x32xf32>
    %19 = arith.addf %16, %18 : vector<8x32xf32>
    %c0_13 = arith.constant 0 : index
    %c0_14 = arith.constant 0 : index
    %20 = vector.load %arg7[%c0_13, %c0_14] : memref<8x32xf32, #tpu.memory_space<vmem>>, vector<8x32xf32>
    tpu.vector_store %arg7[%c0_13, %c0_14], %19 {strides = array<i32>} : memref<8x32xf32, #tpu.memory_space<vmem>>, vector<8x32xf32>,
    %c0_i32_15 = arith.constant 0 : i32
    %21 = arith.cmpi eq, %arg1, %c0_i32_15 : i32
    %22 = arith.extui %21 : i1 to i32
    %c0_i32_16 = arith.constant 0 : i32
    %23 = arith.cmpi ne, %22, %c0_i32_16 : i32
    scf.if %23 {
      %c0_17 = arith.constant 0 : index
      %c0_18 = arith.constant 0 : index
      %24 = vector.load %arg7[%c0_17, %c0_18] : memref<8x32xf32, #tpu.memory_space<vmem>>, vector<8x32xf32>
      %25 = arith.truncf %24 : vector<8x32xf32> to vector<8x32xbf16>
      %c0_19 = arith.constant 0 : index
      %c0_20 = arith.constant 0 : index
      %26 = vector.load %arg6[%c0_19, %c0_20] : memref<8x32xbf16, #tpu.memory_space<vmem>>, vector<8x32xbf16>
      tpu.vector_store %arg6[%c0_19, %c0_20], %25 {strides = array<i32>} : memref<8x32xbf16, #tpu.memory_space<vmem>>, vector<8x32xbf16>,
    } else {
    }
    return
  }
  func.func @transform_0(%arg0: i32, %arg1: i32) -> (i32, i32) {
    %c0_i32 = arith.constant 0 : i32
    %c0_i32_0 = arith.constant 0 : i32
    return %arg0, %c0_i32 : i32, i32
  }
  func.func @transform_1(%arg0: i32, %arg1: i32) -> (i32, i32) {
    %c0_i32 = arith.constant 0 : i32
    %c0_i32_0 = arith.constant 0 : i32
    return %c0_i32, %arg1 : i32, i32
  }
  func.func @transform_2(%arg0: i32, %arg1: i32) -> (i32, i32) {
    %c0_i32 = arith.constant 0 : i32
    %c0_i32_0 = arith.constant 0 : i32
    return %c0_i32, %arg1 : i32, i32
  }
  func.func @transform_3(%arg0: i32, %arg1: i32) -> (i32, i32) {
    %c0_i32 = arith.constant 0 : i32
    %c0_i32_0 = arith.constant 0 : i32
    return %arg1, %c0_i32 : i32, i32
  }
  func.func @transform_4(%arg0: i32, %arg1: i32) -> (i32, i32) {
    %c0_i32 = arith.constant 0 : i32
    %c0_i32_0 = arith.constant 0 : i32
    return %arg0, %c0_i32 : i32, i32
  }
}

</mosaic_0001>

<llo_original>
// kernel: tpu_custom_call.1
$region0: #{tpu_custom_call.1}
  #allocation0 [shape = 'u32[]', space=smem, size = 0x4, offset = 0x4, fixed_abs, tag = 'smem constant byte address 0x4 - core index']
  #allocation1 [shape = 'u32[144,128]{1,0:T(1,128)}', space=vmem, size = 0x12000, scoped, tag = 'internal scratch']
  #allocation2 [shape = 'f32[8,32]{1,0:T(8,128)}', space=vmem, size = 0x1000, scoped, tag = 'scratch operand']
  %s0 = inlined_call_operand.vmem [shape: bf16[16,32], index: 0, kind: input, shape index: {}]
  %s1 = inlined_call_operand.vmem [shape: bf16[32,256], index: 1, kind: input, shape index: {}]
  %s2 = inlined_call_operand.vmem [shape: bf16[32,256], index: 2, kind: input, shape index: {}]
  %s3 = inlined_call_operand.vmem [shape: bf16[256,32], index: 3, kind: input, shape index: {}]
  %s4 = inlined_call_operand.hbm [shape: bf16[16,32], index: 4, kind: output, shape index: {}]
  %s5 = sld [smem:[#allocation0]]
  $region57: #{tpu_custom_call.1} parent=0
    _
  %s7 = ssub.s32 1, %s5
  %s8 = scalar_select 0, %s7, %s5
  $region1: #{tpu_custom_call.1} parent=0
    #allocation3 [shape = 'u8[4096]{0}', space=vmem, size = 0x1000, scoped, tag = 'output window, operand 0']
    #allocation4 [shape = 's32[2]{0}', space=sflag, size = 0x8, scoped, tag = 'scoped memory for tpu_custom_call.1']
    %9 = vsyncpa [#allocation4], 0
    %s10 = scalar_lea.sflag [#allocation4], 1
    %11 = vsyncpa %s10, 0
    loop: start=0, step=1, limit=4
    $region2: #{tpu_custom_call.1} parent=1 // loop_pre_header
      _
    $region3: #{tpu_custom_call.1} parent=1 // loop_header
      %s13 = sphi 0, %s17
      %p14 = scmp.ge.s32.totalorder %s13, 4
      %s20 = sphi 0, %s32
      %s21 = sphi 0, %s28
      %s22 = sphi 0, %s20
      %s23 = sphi 0, %s21
      %s24 = sphi 0, %s22
      %s25 = sphi 0, %s23
      %s35 = sphi 0, %s37
      %s38 = sphi 0, %s35
      %s39 = sphi 0, %s38
      %s55 = sphi 0, %s39
      %s61 = sphi 0, %s63
      %s64 = sphi 0, %s61
      %s65 = sphi 0, %s64
      %s81 = sphi 0, %s65
      %s87 = sphi 0, %s89
      %s90 = sphi 0, %s87
      %s91 = sphi 0, %s90
      %s107 = sphi 0, %s91
      %s113 = sphi 0, %s115
      %s116 = sphi 0, %s113
      %s117 = sphi 0, %s116
      %s133 = sphi 0, %s117
      %s139 = sphi 0, %s141
      %s142 = sphi 0, %s139
      %s143 = sphi 0, %s142
      %s159 = sphi 0, %s143
    $region4: #{tpu_custom_call.1} parent=1 // loop_header_branch
      %16 = sbr.rel (%p14) target = $region8
    $region5: #{tpu_custom_call.1} parent=1 // loop_body
      %s18 = ssub.s32 %s13, 1
      %s19 = ssub.s32 %s13, 2
      %s26 = sadd.s32 1, %s21
      %p27 = scmp.ge.s32.totalorder %s26, 1
      %s28 = scalar_select %p27, 0, %s26
      %s29 = sadd.s32 1, %s20
      %s30 = scalar_select %p27, %s29, %s20
      %p31 = scmp.ge.s32.totalorder %s30, 2
      %s32 = scalar_select %p31, 0, %s30
      %s33 = ssub.s32 %s20, %s32
      %p34 = scmp.eq.s32.totalorder %s33, 0
      %s36 = sadd.s32 %s35, 1
      %s37 = scalar_select %p34, %s35, %s36
      %p40 = pneg %p34
      %p41 = scmp.eq.s32.totalorder %s13, 1
      %p42 = por %p40, %p41
      %p43 = scmp.ne.s32.totalorder %s35, %s38
      %p44 = scmp.eq.s32.totalorder %s13, 0
      %p45 = por %p43, %p44
      %p46 = scmp.ne.s32.totalorder %s35, %s38
      %p47 = scmp.eq.s32.totalorder %s18, 1
      %p48 = por %p46, %p47
      %p49 = scmp.ne.s32.totalorder %s38, %s39
      %p50 = scmp.eq.s32.totalorder %s18, 0
      %p51 = por %p49, %p50
      %p52 = scmp.ne.s32.totalorder %s38, %s39
      %p53 = scmp.eq.s32.totalorder %s19, 1
      %p54 = por %p52, %p53
      %p56 = scmp.ne.s32.totalorder %s39, %s55
      %p57 = scmp.eq.s32.totalorder %s19, 0
      %p58 = por %p56, %p57
      %s59 = ssub.s32 %s21, %s28
      %p60 = scmp.eq.s32.totalorder %s59, 0
      %s62 = sadd.s32 %s61, 1
      %s63 = scalar_select %p60, %s61, %s62
      %p66 = pneg %p60
      %p67 = scmp.eq.s32.totalorder %s13, 1
      %p68 = por %p66, %p67
      %p69 = scmp.ne.s32.totalorder %s61, %s64
      %p70 = scmp.eq.s32.totalorder %s13, 0
      %p71 = por %p69, %p70
      %p72 = scmp.ne.s32.totalorder %s61, %s64
      %p73 = scmp.eq.s32.totalorder %s18, 1
      %p74 = por %p72, %p73
      %p75 = scmp.ne.s32.totalorder %s64, %s65
      %p76 = scmp.eq.s32.totalorder %s18, 0
      %p77 = por %p75, %p76
      %p78 = scmp.ne.s32.totalorder %s64, %s65
      %p79 = scmp.eq.s32.totalorder %s19, 1
      %p80 = por %p78, %p79
      %p82 = scmp.ne.s32.totalorder %s65, %s81
      %p83 = scmp.eq.s32.totalorder %s19, 0
      %p84 = por %p82, %p83
      %s85 = ssub.s32 %s21, %s28
      %p86 = scmp.eq.s32.totalorder %s85, 0
      %s88 = sadd.s32 %s87, 1
      %s89 = scalar_select %p86, %s87, %s88
      %p92 = pneg %p86
      %p93 = scmp.eq.s32.totalorder %s13, 1
      %p94 = por %p92, %p93
      %p95 = scmp.ne.s32.totalorder %s87, %s90
      %p96 = scmp.eq.s32.totalorder %s13, 0
      %p97 = por %p95, %p96
      %p98 = scmp.ne.s32.totalorder %s87, %s90
      %p99 = scmp.eq.s32.totalorder %s18, 1
      %p100 = por %p98, %p99
      %p101 = scmp.ne.s32.totalorder %s90, %s91
      %p102 = scmp.eq.s32.totalorder %s18, 0
      %p103 = por %p101, %p102
      %p104 = scmp.ne.s32.totalorder %s90, %s91
      %p105 = scmp.eq.s32.totalorder %s19, 1
      %p106 = por %p104, %p105
      %p108 = scmp.ne.s32.totalorder %s91, %s107
      %p109 = scmp.eq.s32.totalorder %s19, 0
      %p110 = por %p108, %p109
      %s111 = ssub.s32 %s21, %s28
      %p112 = scmp.eq.s32.totalorder %s111, 0
      %s114 = sadd.s32 %s113, 1
      %s115 = scalar_select %p112, %s113, %s114
      %p118 = pneg %p112
      %p119 = scmp.eq.s32.totalorder %s13, 1
      %p120 = por %p118, %p119
      %p121 = scmp.ne.s32.totalorder %s113, %s116
      %p122 = scmp.eq.s32.totalorder %s13, 0
      %p123 = por %p121, %p122
      %p124 = scmp.ne.s32.totalorder %s113, %s116
      %p125 = scmp.eq.s32.totalorder %s18, 1
      %p126 = por %p124, %p125
      %p127 = scmp.ne.s32.totalorder %s116, %s117
      %p128 = scmp.eq.s32.totalorder %s18, 0
      %p129 = por %p127, %p128
      %p130 = scmp.ne.s32.totalorder %s116, %s117
      %p131 = scmp.eq.s32.totalorder %s19, 1
      %p132 = por %p130, %p131
      %p134 = scmp.ne.s32.totalorder %s117, %s133
      %p135 = scmp.eq.s32.totalorder %s19, 0
      %p136 = por %p134, %p135
      %s137 = ssub.s32 %s20, %s32
      %p138 = scmp.eq.s32.totalorder %s137, 0
      %s140 = sadd.s32 %s139, 1
      %s141 = scalar_select %p138, %s139, %s140
      %p144 = pneg %p138
      %p145 = scmp.eq.s32.totalorder %s13, 1
      %p146 = por %p144, %p145
      %p147 = scmp.ne.s32.totalorder %s139, %s142
      %p148 = scmp.eq.s32.totalorder %s13, 0
      %p149 = por %p147, %p148
      %p150 = scmp.ne.s32.totalorder %s139, %s142
      %p151 = scmp.eq.s32.totalorder %s18, 1
      %p152 = por %p150, %p151
      %p153 = scmp.ne.s32.totalorder %s142, %s143
      %p154 = scmp.eq.s32.totalorder %s18, 0
      %p155 = por %p153, %p154
      %p156 = scmp.ne.s32.totalorder %s142, %s143
      %p157 = scmp.eq.s32.totalorder %s19, 1
      %p158 = por %p156, %p157
      %p160 = scmp.ne.s32.totalorder %s143, %s159
      %p161 = scmp.eq.s32.totalorder %s19, 0
      %p162 = por %p160, %p161
      %p163 = scmp.le.s32.totalorder 1, %s13
      %p164 = scmp.lt.s32.totalorder %s13, 3
      %p165 = pnand %p163, %p164
      %p166 = pneg %p165
      // Predicated region
      $region9: #{tpu_custom_call.1} parent=5 // pred_check
        _
      $region10: #{tpu_custom_call.1} parent=5 // pred_check_branch
        %168 = sbr.rel (%p165) target = $region12
      $region11: #{tpu_custom_call.1} parent=5 // pred_region
        %s169 = ssub.s32 %s13, 1
        // Predicated region
        $region13: #{tpu_custom_call.1} parent=11 // pred_check
          %p170 = pneg %p77
        $region14: #{tpu_custom_call.1} parent=11 // pred_check_branch
          %172 = sbr.rel (%p170) target = $region16
        $region15: #{tpu_custom_call.1} parent=11 // pred_region
          %s173 = smul.u32 2, %s23
          %p174 = scmp.lt.s32.totalorder %s173, 1
          %s175 = scalar_select %p174, %s173, 1
          %s176 = smul.addr %s175, 4
          %s177 = scalar_lea.vmem %s1, %s176
          %s178 = smul.u32 2, %s23
        $region16: #{tpu_custom_call.1} parent=11 // pred_fallthru
          _
        // Predicated region
        $region17: #{tpu_custom_call.1} parent=11 // pred_check
          %p179 = pneg %p103
        $region18: #{tpu_custom_call.1} parent=11 // pred_check_branch
          %181 = sbr.rel (%p179) target = $region20
        $region19: #{tpu_custom_call.1} parent=11 // pred_region
          %s182 = smul.u32 2, %s23
          %p183 = scmp.lt.s32.totalorder %s182, 1
          %s184 = scalar_select %p183, %s182, 1
          %s185 = smul.addr %s184, 4
          %s186 = scalar_lea.vmem %s2, %s185
          %s187 = smul.u32 2, %s23
        $region20: #{tpu_custom_call.1} parent=11 // pred_fallthru
          _
        // Predicated region
        $region21: #{tpu_custom_call.1} parent=11 // pred_check
          %p188 = pneg %p129
        $region22: #{tpu_custom_call.1} parent=11 // pred_check_branch
          %190 = sbr.rel (%p188) target = $region24
        $region23: #{tpu_custom_call.1} parent=11 // pred_region
          %s191 = smul.u32 32, %s23
          %p192 = scmp.lt.s32.totalorder %s191, 31
          %s193 = scalar_select %p192, %s191, 31
          %s194 = smul.addr %s193, 4
          %s195 = scalar_lea.vmem %s3, %s194
          %s196 = smul.u32 32, %s23
        $region24: #{tpu_custom_call.1} parent=11 // pred_fallthru
          _
      $region12: #{tpu_custom_call.1} parent=5 // pred_fallthru
        _
      %p197 = scmp.lt.s32.totalorder %s13, 2
      // Predicated region
      $region25: #{tpu_custom_call.1} parent=5 // pred_check
        %p198 = pneg %p197
      $region26: #{tpu_custom_call.1} parent=5 // pred_check_branch
        %200 = sbr.rel (%p198) target = $region28
      $region27: #{tpu_custom_call.1} parent=5 // pred_region
        // Predicated region
        $region29: #{tpu_custom_call.1} parent=27 // pred_check
          %p201 = pneg %p45
        $region30: #{tpu_custom_call.1} parent=27 // pred_check_branch
          %203 = sbr.rel (%p201) target = $region32
        $region31: #{tpu_custom_call.1} parent=27 // pred_region
          %p204 = scmp.lt.s32.totalorder %s20, 1
          %s205 = scalar_select %p204, %s20, 1
          %s206 = smul.addr %s205, 4
          %s207 = scalar_lea.vmem %s0, %s206
        $region32: #{tpu_custom_call.1} parent=27 // pred_fallthru
          _
      $region28: #{tpu_custom_call.1} parent=5 // pred_fallthru
        _
      %p208 = scmp.le.s32.totalorder 1, %s13
      %p209 = scmp.lt.s32.totalorder %s13, 3
      %p210 = pnand %p208, %p209
      %p211 = pneg %p210
      // Predicated region
      $region33: #{tpu_custom_call.1} parent=5 // pred_check
        _
      $region34: #{tpu_custom_call.1} parent=5 // pred_check_branch
        %213 = sbr.rel (%p210) target = $region36
      $region35: #{tpu_custom_call.1} parent=5 // pred_region
        %s214 = ssub.s32 %s13, 1
        %p215 = scmp.lt.s32.totalorder %s22, 1
        %s216 = scalar_select %p215, %s22, 1
        %s217 = smul.addr %s216, 4
        %s218 = scalar_lea.vmem %s0, %s217
        %p219 = pneg %p51
        %p220 = pneg %p48
        %s221 = smul.u32 2, %s23
        %p222 = scmp.lt.s32.totalorder %s221, 1
        %s223 = scalar_select %p222, %s221, 1
        %s224 = smul.addr %s223, 4
        %s225 = scalar_lea.vmem %s1, %s224
        %p226 = pneg %p77
        %p227 = pneg %p74
        %s228 = smul.u32 2, %s23
        %p229 = scmp.lt.s32.totalorder %s228, 1
        %s230 = scalar_select %p229, %s228, 1
        %s231 = smul.addr %s230, 4
        %s232 = scalar_lea.vmem %s2, %s231
        %p233 = pneg %p103
        %p234 = pneg %p100
        %s235 = smul.u32 32, %s23
        %p236 = scmp.lt.s32.totalorder %s235, 31
        %s237 = scalar_select %p236, %s235, 31
        %s238 = smul.addr %s237, 4
        %s239 = scalar_lea.vmem %s3, %s238
        %p240 = pneg %p129
        %p241 = pneg %p126
        %p242 = pneg %p155
        %p243 = pneg %p152
        %s244 = sand.u32 %s142, 1
        %s245 = scalar_lea.sflag [#allocation4], %s244
        %s246 = sand.u32 %s142, 1
        %s247 = smul.addr %s246, 4
        %s248 = scalar_lea.vmem [#allocation3], %s247
        %p249 = scmp.lt.s32.totalorder %s22, 1
        %s250 = scalar_select %p249, %s22, 1
        %s251 = smul.addr %s250, 4
        %s252 = scalar_lea.vmem %s0, %s251
        %s253 = smul.u32 2, %s23
        %p254 = scmp.lt.s32.totalorder %s253, 1
        %s255 = scalar_select %p254, %s253, 1
        %s256 = smul.addr %s255, 4
        %s257 = scalar_lea.vmem %s1, %s256
        %s258 = smul.u32 2, %s23
        %s259 = smul.u32 2, %s23
        %p260 = scmp.lt.s32.totalorder %s259, 1
        %s261 = scalar_select %p260, %s259, 1
        %s262 = smul.addr %s261, 4
        %s263 = scalar_lea.vmem %s2, %s262
        %s264 = smul.u32 2, %s23
        %s265 = smul.u32 32, %s23
        %p266 = scmp.lt.s32.totalorder %s265, 31
        %s267 = scalar_select %p266, %s265, 31
        %s268 = smul.addr %s267, 4
        %s269 = scalar_lea.vmem %s3, %s268
        %s270 = smul.u32 32, %s23
        %p272 = scmp.eq.s32.totalorder %s23, 0
        // Predicated region
        $region37: #{tpu_custom_call.1} parent=35 // pred_check
          %p273 = pneg %p272
        $region38: #{tpu_custom_call.1} parent=35 // pred_check_branch
          %275 = sbr.rel (%p273) target = $region40
        $region39: #{tpu_custom_call.1} parent=35 // pred_region
          %vm276 = vcmask 261120
          %277 = vst.msk [vmem:[#allocation2] sm:$0xff] %vm276, 0.0
        $region40: #{tpu_custom_call.1} parent=35 // pred_fallthru
          _
        %v278 = vld [vmem:[%s252] sm:$0xf]
        %v279 = vld [vmem:[%s257] sm:$0xff]
        %v280 = vld [vmem:[%s257 + $0x8] sm:$0xff]
        %v281 = vld [vmem:[%s257 + $0x10] sm:$0xff]
        %v282 = vld [vmem:[%s257 + $0x18] sm:$0xff]
        %v287 = vunpack.c.l.b16 %v279
        %v288 = vunpack.c.h.b16 %v279
        %v289 = vunpack.c.l.b16 %v280
        %v290 = vunpack.c.h.b16 %v280
        %v291 = vunpack.c.l.b16 %v281
        %v292 = vunpack.c.h.b16 %v281
        %v293 = vunpack.c.l.b16 %v282
        %v294 = vunpack.c.h.b16 %v282
        %v295 = vpack.c.b16 %v289, %v287
        %v296 = vpack.c.b16 %v290, %v288
        %v297 = vpack.c.b16 %v293, %v291
        %v298 = vpack.c.b16 %v294, %v292
        %vm303 = vcmask 261120
        %v305 = vsel %vm303, %v278, 0
        %307 = vmatprep.subr.bf16.mxu0 %v296
        %308 = vmatpush1.bf16.msra.mxu0 %v295
        %309 = vmatprep.subr.bf16.mxu0 %v298
        %310 = vmatpush1.bf16.msra.mxu0 %v297
        %311 = vmatprep.subr.bf16.mxu0 0
        %312 = vmatpush1.bf16.msra.mxu0 0
        %313 = vmatprep.subr.bf16.mxu0 0
        %314 = vmatpush1.bf16.msra.mxu0 0
        %315 = vmatprep.subr.bf16.mxu0 0
        %316 = vmatpush1.bf16.msra.mxu0 0
        %317 = vmatprep.subr.bf16.mxu0 0
        %318 = vmatpush1.bf16.msra.mxu0 0
        %319 = vmatprep.subr.bf16.mxu0 0
        %320 = vmatpush1.bf16.msra.mxu0 0
        %321 = vmatprep.subr.bf16.mxu0 0
        %322 = vmatpush1.bf16.msra.mxu0 0
        %323 = vmatprep.subr.bf16.mxu0 0
        %324 = vmatpush1.bf16.msra.mxu0 0
        %325 = vmatprep.subr.bf16.mxu0 0
        %326 = vmatpush1.bf16.msra.mxu0 0
        %327 = vmatprep.subr.bf16.mxu0 0
        %328 = vmatpush1.bf16.msra.mxu0 0
        %329 = vmatprep.subr.bf16.mxu0 0
        %330 = vmatpush1.bf16.msra.mxu0 0
        %331 = vmatprep.subr.bf16.mxu0 0
        %332 = vmatpush1.bf16.msra.mxu0 0
        %333 = vmatprep.subr.bf16.mxu0 0
        %334 = vmatpush1.bf16.msra.mxu0 0
        %335 = vmatprep.subr.bf16.mxu0 0
        %336 = vmatpush1.bf16.msra.mxu0 0
        %337 = vmatprep.subr.bf16.mxu0 0
        %338 = vmatpush1.bf16.msra.mxu0 0
        %339 = vmatprep.mubr.bf16.mxu0 0
        %340 = vmatmul.mubr.bf16.gmra.mrb[0].mxu0 %v305
        %v341 = vpop.f32.mrb[0].mxu0
        %v342 = vadd.f32 0.0, %v341
        %v343 = vpop.f32.mrb[0].mxu0
        %v344 = vadd.f32 0.0, %v343
        %v345 = vpop.f32.mrb[0].mxu0
        %v346 = vpop.f32.mrb[0].mxu0
        %347 = vdwg.mxu0
        %v348 = vld [vmem:[%s263] sm:$0xff]
        %v349 = vld [vmem:[%s263 + $0x8] sm:$0xff]
        %v350 = vld [vmem:[%s263 + $0x10] sm:$0xff]
        %v351 = vld [vmem:[%s263 + $0x18] sm:$0xff]
        %v356 = vunpack.c.l.b16 %v348
        %v357 = vunpack.c.h.b16 %v348
        %v358 = vunpack.c.l.b16 %v349
        %v359 = vunpack.c.h.b16 %v349
        %v360 = vunpack.c.l.b16 %v350
        %v361 = vunpack.c.h.b16 %v350
        %v362 = vunpack.c.l.b16 %v351
        %v363 = vunpack.c.h.b16 %v351
        %v364 = vpack.c.b16 %v358, %v356
        %v365 = vpack.c.b16 %v359, %v357
        %v366 = vpack.c.b16 %v362, %v360
        %v367 = vpack.c.b16 %v363, %v361
        %372 = vmatprep.subr.bf16.mxu0 %v365
        %373 = vmatpush1.bf16.msra.mxu0 %v364
        %374 = vmatprep.subr.bf16.mxu0 %v367
        %375 = vmatpush1.bf16.msra.mxu0 %v366
        %376 = vmatprep.subr.bf16.mxu0 0
        %377 = vmatpush1.bf16.msra.mxu0 0
        %378 = vmatprep.subr.bf16.mxu0 0
        %379 = vmatpush1.bf16.msra.mxu0 0
        %380 = vmatprep.subr.bf16.mxu0 0
        %381 = vmatpush1.bf16.msra.mxu0 0
        %382 = vmatprep.subr.bf16.mxu0 0
        %383 = vmatpush1.bf16.msra.mxu0 0
        %384 = vmatprep.subr.bf16.mxu0 0
        %385 = vmatpush1.bf16.msra.mxu0 0
        %386 = vmatprep.subr.bf16.mxu0 0
        %387 = vmatpush1.bf16.msra.mxu0 0
        %388 = vmatprep.subr.bf16.mxu0 0
        %389 = vmatpush1.bf16.msra.mxu0 0
        %390 = vmatprep.subr.bf16.mxu0 0
        %391 = vmatpush1.bf16.msra.mxu0 0
        %392 = vmatprep.subr.bf16.mxu0 0
        %393 = vmatpush1.bf16.msra.mxu0 0
        %394 = vmatprep.subr.bf16.mxu0 0
        %395 = vmatpush1.bf16.msra.mxu0 0
        %396 = vmatprep.subr.bf16.mxu0 0
        %397 = vmatpush1.bf16.msra.mxu0 0
        %398 = vmatprep.subr.bf16.mxu0 0
        %399 = vmatpush1.bf16.msra.mxu0 0
        %400 = vmatprep.subr.bf16.mxu0 0
        %401 = vmatpush1.bf16.msra.mxu0 0
        %402 = vmatprep.subr.bf16.mxu0 0
        %403 = vmatpush1.bf16.msra.mxu0 0
        %404 = vmatprep.mubr.bf16.mxu0 0
        %405 = vmatmul.mubr.bf16.gmra.mrb[0].mxu0 %v305
        %v406 = vpop.f32.mrb[0].mxu0
        %v407 = vadd.f32 0.0, %v406
        %v408 = vpop.f32.mrb[0].mxu0
        %v409 = vadd.f32 0.0, %v408
        %v410 = vpop.f32.mrb[0].mxu0
        %v411 = vpop.f32.mrb[0].mxu0
        %412 = vdwg.mxu0
        %v413 = vxor.u32 %v342, 2147483648
        %v414 = vxor.u32 %v344, 2147483648
        %v415 = vmul.f32 %v413, 1.442695
        %v416 = vpow.pop %v415
        %v417 = vmul.f32 %v414, 1.442695
        %v418 = vpow.pop %v417
        %v419 = vadd.f32 %v416, 1.0
        %v420 = vadd.f32 %v418, 1.0
        %v421 = vrcp.pop %v419
        %v422 = vmul.f32 1.0, %v421
        %v423 = vrcp.pop %v420
        %v424 = vmul.f32 1.0, %v423
        %v425 = vmul.f32 %v342, %v422
        %v426 = vmul.f32 %v344, %v424
        %v427 = vmul.f32 %v425, %v407
        %v428 = vmul.f32 %v426, %v409
        %v429 = vpack.c.bf16 %v427, %v427
        %v430 = vpack.c.bf16 %v428, %v428
        %v431 = vld [vmem:[#allocation2] sm:$0xff]
        %v432 = vld [vmem:[%s269] sm:$0xf]
        %v433 = vld [vmem:[%s269 + $0x4] sm:$0xf]
        %v434 = vld [vmem:[%s269 + $0x8] sm:$0xf]
        %v435 = vld [vmem:[%s269 + $0xc] sm:$0xf]
        %v436 = vld [vmem:[%s269 + $0x10] sm:$0xf]
        %v437 = vld [vmem:[%s269 + $0x14] sm:$0xf]
        %v438 = vld [vmem:[%s269 + $0x18] sm:$0xf]
        %v439 = vld [vmem:[%s269 + $0x1c] sm:$0xf]
        %v440 = vld [vmem:[%s269 + $0x20] sm:$0xf]
        %v441 = vld [vmem:[%s269 + $0x24] sm:$0xf]
        %v442 = vld [vmem:[%s269 + $0x28] sm:$0xf]
        %v443 = vld [vmem:[%s269 + $0x2c] sm:$0xf]
        %v444 = vld [vmem:[%s269 + $0x30] sm:$0xf]
        %v445 = vld [vmem:[%s269 + $0x34] sm:$0xf]
        %v446 = vld [vmem:[%s269 + $0x38] sm:$0xf]
        %v447 = vld [vmem:[%s269 + $0x3c] sm:$0xf]
        %v448 = vld [vmem:[%s269 + $0x40] sm:$0xf]
        %v449 = vld [vmem:[%s269 + $0x44] sm:$0xf]
        %v450 = vld [vmem:[%s269 + $0x48] sm:$0xf]
        %v451 = vld [vmem:[%s269 + $0x4c] sm:$0xf]
        %v452 = vld [vmem:[%s269 + $0x50] sm:$0xf]
        %v453 = vld [vmem:[%s269 + $0x54] sm:$0xf]
        %v454 = vld [vmem:[%s269 + $0x58] sm:$0xf]
        %v455 = vld [vmem:[%s269 + $0x5c] sm:$0xf]
        %v456 = vld [vmem:[%s269 + $0x60] sm:$0xf]
        %v457 = vld [vmem:[%s269 + $0x64] sm:$0xf]
        %v458 = vld [vmem:[%s269 + $0x68] sm:$0xf]
        %v459 = vld [vmem:[%s269 + $0x6c] sm:$0xf]
        %v460 = vld [vmem:[%s269 + $0x70] sm:$0xf]
        %v461 = vld [vmem:[%s269 + $0x74] sm:$0xf]
        %v462 = vld [vmem:[%s269 + $0x78] sm:$0xf]
        %v463 = vld [vmem:[%s269 + $0x7c] sm:$0xf]
        %v496 = vunpack.c.l.b16 %v432
        %v497 = vunpack.c.l.b16 %v433
        %v498 = vunpack.c.l.b16 %v434
        %v499 = vunpack.c.l.b16 %v435
        %v500 = vunpack.c.l.b16 %v436
        %v501 = vunpack.c.l.b16 %v437
        %v502 = vunpack.c.l.b16 %v438
        %v503 = vunpack.c.l.b16 %v439
        %v504 = vunpack.c.l.b16 %v440
        %v505 = vunpack.c.l.b16 %v441
        %v506 = vunpack.c.l.b16 %v442
        %v507 = vunpack.c.l.b16 %v443
        %v508 = vunpack.c.l.b16 %v444
        %v509 = vunpack.c.l.b16 %v445
        %v510 = vunpack.c.l.b16 %v446
        %v511 = vunpack.c.l.b16 %v447
        %v512 = vunpack.c.l.b16 %v448
        %v513 = vunpack.c.l.b16 %v449
        %v514 = vunpack.c.l.b16 %v450
        %v515 = vunpack.c.l.b16 %v451
        %v516 = vunpack.c.l.b16 %v452
        %v517 = vunpack.c.l.b16 %v453
        %v518 = vunpack.c.l.b16 %v454
        %v519 = vunpack.c.l.b16 %v455
        %v520 = vunpack.c.l.b16 %v456
        %v521 = vunpack.c.l.b16 %v457
        %v522 = vunpack.c.l.b16 %v458
        %v523 = vunpack.c.l.b16 %v459
        %v524 = vunpack.c.l.b16 %v460
        %v525 = vunpack.c.l.b16 %v461
        %v526 = vunpack.c.l.b16 %v462
        %v527 = vunpack.c.l.b16 %v463
        %v528 = vpack.c.b16 %v497, %v496
        %v529 = vpack.c.b16 %v499, %v498
        %v530 = vpack.c.b16 %v501, %v500
        %v531 = vpack.c.b16 %v503, %v502
        %v532 = vpack.c.b16 %v505, %v504
        %v533 = vpack.c.b16 %v507, %v506
        %v534 = vpack.c.b16 %v509, %v508
        %v535 = vpack.c.b16 %v511, %v510
        %v536 = vpack.c.b16 %v513, %v512
        %v537 = vpack.c.b16 %v515, %v514
        %v538 = vpack.c.b16 %v517, %v516
        %v539 = vpack.c.b16 %v519, %v518
        %v540 = vpack.c.b16 %v521, %v520
        %v541 = vpack.c.b16 %v523, %v522
        %v542 = vpack.c.b16 %v525, %v524
        %v543 = vpack.c.b16 %v527, %v526
        %560 = vmatprep.subr.bf16.mxu0 0
        %561 = vmatpush1.bf16.msra.mxu0 %v528
        %562 = vmatprep.subr.bf16.mxu0 0
        %563 = vmatpush1.bf16.msra.mxu0 %v529
        %564 = vmatprep.subr.bf16.mxu0 0
        %565 = vmatpush1.bf16.msra.mxu0 %v530
        %566 = vmatprep.subr.bf16.mxu0 0
        %567 = vmatpush1.bf16.msra.mxu0 %v531
        %568 = vmatprep.subr.bf16.mxu0 0
        %569 = vmatpush1.bf16.msra.mxu0 %v532
        %570 = vmatprep.subr.bf16.mxu0 0
        %571 = vmatpush1.bf16.msra.mxu0 %v533
        %572 = vmatprep.subr.bf16.mxu0 0
        %573 = vmatpush1.bf16.msra.mxu0 %v534
        %574 = vmatprep.subr.bf16.mxu0 0
        %575 = vmatpush1.bf16.msra.mxu0 %v535
        %576 = vmatprep.subr.bf16.mxu0 0
        %577 = vmatpush1.bf16.msra.mxu0 %v536
        %578 = vmatprep.subr.bf16.mxu0 0
        %579 = vmatpush1.bf16.msra.mxu0 %v537
        %580 = vmatprep.subr.bf16.mxu0 0
        %581 = vmatpush1.bf16.msra.mxu0 %v538
        %582 = vmatprep.subr.bf16.mxu0 0
        %583 = vmatpush1.bf16.msra.mxu0 %v539
        %584 = vmatprep.subr.bf16.mxu0 0
        %585 = vmatpush1.bf16.msra.mxu0 %v540
        %586 = vmatprep.subr.bf16.mxu0 0
        %587 = vmatpush1.bf16.msra.mxu0 %v541
        %588 = vmatprep.subr.bf16.mxu0 0
        %589 = vmatpush1.bf16.msra.mxu0 %v542
        %590 = vmatprep.subr.bf16.mxu0 0
        %591 = vmatpush1.bf16.msra.mxu0 %v543
        %592 = vmatprep.mubr.bf16.mxu0 %v430
        %593 = vmatmul.mubr.bf16.gmra.mrb[0].mxu0 %v429
        %v594 = vpop.f32.mrb[0].mxu0
        %v595 = vadd.f32 0.0, %v594
        %v596 = vpop.f32.mrb[0].mxu0
        %v597 = vpop.f32.mrb[0].mxu0
        %v598 = vpop.f32.mrb[0].mxu0
        %599 = vdwg.mxu0
        %v600 = vadd.f32 %v431, %v595
        %601 = vst.msk [vmem:[#allocation2] sm:$0xff] %vm303, %v600
        // Predicated region
        $region41: #{tpu_custom_call.1} parent=35 // pred_check
          %p602 = pneg %p272
        $region42: #{tpu_custom_call.1} parent=35 // pred_check_branch
          %604 = sbr.rel (%p602) target = $region44
        $region43: #{tpu_custom_call.1} parent=35 // pred_region
          %v605 = vld [vmem:[#allocation2] sm:$0xff]
          %v606 = vpack.c.bf16 %v605, %v605
          %vm607 = vcmask 257024
          %608 = vst.msk [vmem:[%s248] sm:$0xf] %vm607, %v606
        $region44: #{tpu_custom_call.1} parent=35 // pred_fallthru
          _
        %s609 = sand.u32 %s142, 1
        %s610 = scalar_lea.sflag [#allocation4], %s609
        %s611 = sand.u32 %s142, 1
        %s612 = smul.addr %s611, 4
        %s613 = scalar_lea.vmem [#allocation3], %s612
        // Predicated region
        $region45: #{tpu_custom_call.1} parent=35 // pred_check
          %p614 = pneg %p152
        $region46: #{tpu_custom_call.1} parent=35 // pred_check_branch
          %616 = sbr.rel (%p614) target = $region48
        $region47: #{tpu_custom_call.1} parent=35 // pred_region
          %s618 = ssub.s32 64, 64
          %619 = vsyncadd %s610, %s618
          %s620 = smul.addr %s22, 64
          %s621 = scalar_lea.hbm %s4, %s620
          %s623 = sshll.u32 %s613, 4
          %s624 = int_to_ptr.vmem [resolvable:$true] %s623
          %626 = dma.vmem_to_hbm [thread:$0]  %s624, 64, %s621, %s610
        $region48: #{tpu_custom_call.1} parent=35 // pred_fallthru
          _
      $region36: #{tpu_custom_call.1} parent=5 // pred_fallthru
        _
      %p627 = scmp.le.s32.totalorder 2, %s13
      // Predicated region
      $region49: #{tpu_custom_call.1} parent=5 // pred_check
        %p628 = pneg %p627
      $region50: #{tpu_custom_call.1} parent=5 // pred_check_branch
        %630 = sbr.rel (%p628) target = $region52
      $region51: #{tpu_custom_call.1} parent=5 // pred_region
        %s631 = ssub.s32 %s13, 2
        // Predicated region
        $region53: #{tpu_custom_call.1} parent=51 // pred_check
          %p632 = pneg %p158
        $region54: #{tpu_custom_call.1} parent=51 // pred_check_branch
          %634 = sbr.rel (%p632) target = $region56
        $region55: #{tpu_custom_call.1} parent=51 // pred_region
          %s635 = sand.u32 %s143, 1
          %s636 = scalar_lea.sflag [#allocation4], %s635
          %s637 = sand.u32 %s143, 1
          %s638 = smul.addr %s637, 4
          %s639 = scalar_lea.vmem [#allocation3], %s638
          %640 = dma.done %s636, 64
        $region56: #{tpu_custom_call.1} parent=51 // pred_fallthru
          _
      $region52: #{tpu_custom_call.1} parent=5 // pred_fallthru
        _
    $region6: #{tpu_custom_call.1} parent=1 // loop_footer
      %s17 = sadd.s32 1, %s13
    $region7: #{tpu_custom_call.1} parent=1 // loop_footer_branch
      %12 = sbr.rel target = $region3
    $region8: #{tpu_custom_call.1} parent=1 // loop_exit
      _
    %641 = vsyncpa [#allocation4], 1
    %s642 = scalar_lea.sflag [#allocation4], 1
    %643 = vsyncpa %s642, 1

</llo_original>
